<compile_context>
chip_gen: v7x
topology: tpu7x:2x2x1
jax: 0.10.0
libtpu: 0.0.40
codegen_flags: <defaults>
</compile_context>

<pallas_src>
import dataclasses
import functools
from typing import Optional

import jax
import jax.numpy as jnp
from jax.experimental import pallas as pl
from jax.experimental.pallas import tpu as pltpu


def _round_up(x: int, m: int) -> int:
    return (x + m - 1) // m * m


def _default_vmem_budget_bytes() -> int:
    """~72% of this generation's VMEM, capped at 96 MiB.

    v5e/v6e (128 MiB) -> ~92 MiB, v7x (64 MiB) -> ~46 MiB, fallback -> ~46 MiB.
    """
    cap = None
    try:
        cap = getattr(pltpu.get_tpu_info(), "vmem_capacity_bytes", None)
    except Exception:
        cap = None
    if not cap:
        cap = 64 * 1024 * 1024  # conservative fallback (v7x per-TC VMEM)
    return min(int(cap * 0.72), 96 * 1024 * 1024)


def _silu(a, approx_sigmoid):
    if approx_sigmoid:
        # EUP exp + EUP approx reciprocal -> keeps the epilogue off the VALU
        # divide path (both land in otherwise-idle bundle slots).
        return a * pl.reciprocal(1.0 + jnp.exp(-a), approx=True)
    return a * jax.nn.sigmoid(a)


def _swiglu_kernel_fused(x_ref, wv_ref, o_ref, *, approx_sigmoid):
    """Single-K-step variant: no K grid axis, no accumulator scratch."""
    tn = o_ref.shape[-1]
    acc = jnp.dot(x_ref[...], wv_ref[...], preferred_element_type=jnp.float32)
    a = acc[:, :tn]          # x @ W^T branch
    b = acc[:, tn:]          # x @ V^T branch
    o_ref[...] = (_silu(a, approx_sigmoid) * b).astype(o_ref.dtype)


def _swiglu_kernel_acc(x_ref, wv_ref, o_ref, acc_ref, *, approx_sigmoid):
    """K-tiled variant: f32 VMEM accumulator resident across the K grid axis."""
    k = pl.program_id(2)

    @pl.when(k == 0)
    def _():
        acc_ref[...] = jnp.zeros_like(acc_ref)

    acc_ref[...] += jnp.dot(x_ref[...], wv_ref[...],
                            preferred_element_type=jnp.float32)

    @pl.when(k == pl.num_programs(2) - 1)
    def _():
        tn = o_ref.shape[-1]
        acc = acc_ref[...]
        a = acc[:, :tn]
        b = acc[:, tn:]
        o_ref[...] = (_silu(a, approx_sigmoid) * b).astype(o_ref.dtype)


@dataclasses.dataclass(frozen=True)
class SwiGLUPlan:
    H: int
    O: int
    compute_dtype: object          # jnp dtype
    tm: int                        # default row tile (clamped per call to M)
    tn: int                        # output tile; packed wv layout depends on it
    tk: int                        # reduction tile
    k_pad: int
    n_pad: int
    approx_sigmoid: bool
    vmem_limit_bytes: int
    wv_buffer_count: Optional[int] = None   # e.g. 3 for decode weight streaming


def plan_swiglu(hidden_size: int, output_size: int, *,
                compute_dtype=jnp.bfloat16,
                tm: int = 1024, tn: int = 1024, tk: int = 1024,
                vmem_budget_bytes: Optional[int] = None,
                approx_sigmoid: Optional[bool] = None,
                wv_buffer_count: Optional[int] = None,
                ensure_two_n_blocks: bool = True) -> SwiGLUPlan:
    """Pick VMEM-budgeted tiles + padded dims once, at init time."""
    H, O = hidden_size, output_size
    compute_dtype = jnp.dtype(compute_dtype)
    itemsize = compute_dtype.itemsize
    budget = (vmem_budget_bytes if vmem_budget_bytes is not None
              else _default_vmem_budget_bytes())
    if approx_sigmoid is None:
        approx_sigmoid = compute_dtype != jnp.dtype(jnp.float32)

    h_rounded = _round_up(H, 128)
    o_rounded = _round_up(O, 128)

    tn_eff = min(tn, o_rounded)
    # Keep >= 2 output-column blocks when O allows so the N grid axis can feed
    # both v7x TensorCores even when M (decode) yields a single row block.
    if ensure_two_n_blocks and o_rounded >= 256 and o_rounded // tn_eff < 2:
        tn_eff = max(128, (o_rounded // 2) // 128 * 128)
    tk_eff = min(tk, h_rounded)
    tm_eff = max(16, tm)

    def footprint(tm_, tn_, tk_):
        # double-buffered x / wv / out blocks + f32 accumulator / epilogue temps
        return (2 * (tm_ * tk_ + tk_ * 2 * tn_ + tm_ * tn_) * itemsize
                + tm_ * 2 * tn_ * 4)

    # Shrink tiles until the double-buffered footprint fits this generation's
    # VMEM budget (defaults: bf16 1024^3 ~ 24 MiB -> fits v5e/v6e/v7x unshrunk).
    for _ in range(64):
        if footprint(tm_eff, tn_eff, tk_eff) <= budget:
            break
        if tk_eff >= max(tm_eff, tn_eff) and tk_eff > 128:
            tk_eff = max(128, ((tk_eff // 2 + 127) // 128) * 128)
        elif tm_eff >= tn_eff and tm_eff > 16:
            tm_eff = max(16, tm_eff // 2)
        elif tn_eff > 128:
            tn_eff = max(128, tn_eff // 2)
        elif tm_eff > 16:
            tm_eff = max(16, tm_eff // 2)
        elif tk_eff > 128:
            tk_eff = max(128, ((tk_eff // 2 + 127) // 128) * 128)
        else:
            break

    k_pad = _round_up(H, tk_eff)
    n_pad = _round_up(O, tn_eff)

    vmem_limit = max(budget, footprint(tm_eff, tn_eff, tk_eff) + (4 << 20))

    return SwiGLUPlan(H=H, O=O, compute_dtype=compute_dtype,
                      tm=tm_eff, tn=tn_eff, tk=tk_eff,
                      k_pad=k_pad, n_pad=n_pad,
                      approx_sigmoid=bool(approx_sigmoid),
                      vmem_limit_bytes=int(vmem_limit),
                      wv_buffer_count=wv_buffer_count)


def pack_swiglu_weights(W, V, plan: SwiGLUPlan):
    """Pack PyTorch-layout W, V (both (O, H)) into one interleaved matrix.

    Result shape (k_pad, n_blocks*2*tn): output-tile j occupies columns
    [j*2*tn, (j+1)*2*tn), first tn from W, next tn from V.  Done ONCE at init
    (inside make_swiglu), in the compute dtype — not on the forward path.
    """
    O, H = W.shape
    assert (O, H) == (plan.O, plan.H)
    tn, k_pad, n_pad = plan.tn, plan.k_pad, plan.n_pad
    n_blocks = n_pad // tn
    Wt = jnp.pad(W.T.astype(plan.compute_dtype),
                 ((0, k_pad - H), (0, n_pad - O)))
    Vt = jnp.pad(V.T.astype(plan.compute_dtype),
                 ((0, k_pad - H), (0, n_pad - O)))
    wv = jnp.stack([Wt.reshape(k_pad, n_blocks, tn),
                    Vt.reshape(k_pad, n_blocks, tn)], axis=2)
    return wv.reshape(k_pad, n_blocks * 2 * tn)


def _swiglu_call(x2d, wv, plan: SwiGLUPlan, tm: int, m_pad: int, out_dtype):
    tn, tk, k_pad, n_pad = plan.tn, plan.tk, plan.k_pad, plan.n_pad
    m_blocks, n_blocks, k_blocks = m_pad // tm, n_pad // tn, k_pad // tk
    itemsize = jnp.dtype(plan.compute_dtype).itemsize

    # Bytes include refetch factors: x re-read per output-column block, wv
    # re-read per row block.
    cost = pl.CostEstimate(
        flops=2 * m_pad * (2 * n_pad) * k_pad,
        transcendentals=m_pad * n_pad,
        bytes_accessed=(m_pad * k_pad * itemsize) * n_blocks
        + (k_pad * 2 * n_pad * itemsize) * m_blocks
        + m_pad * n_pad * jnp.dtype(out_dtype).itemsize,
    )

    wv_kwargs = {}
    if plan.wv_buffer_count is not None:
        # Deeper weight-stream buffering (decode / small-tm regime only).
        wv_kwargs["pipeline_mode"] = pl.Buffered(plan.wv_buffer_count)

    if k_blocks == 1:
        kernel = functools.partial(_swiglu_kernel_fused,
                                   approx_sigmoid=plan.approx_sigmoid)
        grid_spec = pltpu.PrefetchScalarGridSpec(
            num_scalar_prefetch=0,
            grid=(m_blocks, n_blocks),
            in_specs=[
                pl.BlockSpec((tm, k_pad), lambda i, j: (i, 0)),
                pl.BlockSpec((k_pad, 2 * tn), lambda i, j: (0, j), **wv_kwargs),
            ],
            out_specs=pl.BlockSpec((tm, tn), lambda i, j: (i, j)),
        )
        semantics = ("parallel", "parallel")
    else:
        kernel = functools.partial(_swiglu_kernel_acc,
                                   approx_sigmoid=plan.approx_sigmoid)
        grid_spec = pltpu.PrefetchScalarGridSpec(
            num_scalar_prefetch=0,
            grid=(m_blocks, n_blocks, k_blocks),
            in_specs=[
                pl.BlockSpec((tm, tk), lambda i, j, k: (i, k)),
                pl.BlockSpec((tk, 2 * tn), lambda i, j, k: (k, j), **wv_kwargs),
            ],
            out_specs=pl.BlockSpec((tm, tn), lambda i, j, k: (i, j)),
            scratch_shapes=[pltpu.VMEM((tm, 2 * tn), jnp.float32)],
        )
        semantics = ("parallel", "parallel", "arbitrary")

    return pl.pallas_call(
        kernel,
        out_shape=jax.ShapeDtypeStruct((m_pad, n_pad), out_dtype),
        grid_spec=grid_spec,
        compiler_params=pltpu.CompilerParams(
            dimension_semantics=semantics,
            vmem_limit_bytes=plan.vmem_limit_bytes,
        ),
        cost_estimate=cost,
    )(x2d, wv)


def swiglu_apply(x, wv_packed, plan: SwiGLUPlan, *, out_dtype=None):
    """Forward pass with pre-packed weights. x: (..., H) -> (..., O)."""
    orig_shape = x.shape
    assert orig_shape[-1] == plan.H
    out_dtype = jnp.dtype(out_dtype) if out_dtype is not None else x.dtype

    x2d = x.reshape(-1, plan.H).astype(plan.compute_dtype)
    M = x2d.shape[0]
    tm = min(plan.tm, _round_up(M, 16))
    m_pad = _round_up(M, tm)
    if (m_pad, plan.k_pad) != (M, plan.H):
        # No-op for production shapes (M % tm == 0, H % 128 == 0).
        x2d = jnp.pad(x2d, ((0, m_pad - M), (0, plan.k_pad - plan.H)))

    out = _swiglu_call(x2d, wv_packed, plan, tm, m_pad, out_dtype)
    out = out[:M, :plan.O]
    return out.reshape(*orig_shape[:-1], plan.O)


def make_swiglu(W, V, **plan_kwargs):
    """Build a SwiGLU forward fn with weights packed ONCE at init time.

    W, V: (out_features, in_features) — nn.Linear weight layout, bias=False.
    """
    O, H = W.shape
    plan = plan_swiglu(H, O, **plan_kwargs)
    wv_packed = pack_swiglu_weights(W, V, plan)   # tn-coupled layout lives with plan
    # TODO(synk): optional int8 (v5e/v6e) / fp8 (v7x) packing of wv_packed for
    # decode weight-streaming regimes.

    def forward(x, out_dtype=None):
        return swiglu_apply(x, wv_packed, plan, out_dtype=out_dtype)

    return forward


def swiglu(x, W, V, **plan_kwargs):
    """Convenience one-shot wrapper (plans + packs per call — tests/debug only)."""
    return make_swiglu(W, V, **plan_kwargs)(x)


if __name__ == "__main__":
    # Small shapes consistent with the module: batch=2, seq=8, hidden=32, out=64
    B, S, hidden_size, output_size = 2, 8, 32, 64

    key = jax.random.PRNGKey(0)
    kx, kw, kv, kx2, kw2, kv2 = jax.random.split(key, 6)

    x = jax.random.normal(kx, (B, S, hidden_size), dtype=jnp.float32)
    # nn.Linear weight layout: (out_features, in_features), bias=False
    W = jax.random.normal(kw, (output_size, hidden_size), dtype=jnp.float32) * 0.1
    V = jax.random.normal(kv, (output_size, hidden_size), dtype=jnp.float32) * 0.1

    a_ref = x @ W.T
    ref = (a_ref * jax.nn.sigmoid(a_ref)) * (x @ V.T)

    # --- f32 debug path (exact sigmoid): tight correctness check ---
    fwd_f32 = make_swiglu(W, V, compute_dtype=jnp.float32)
    out_f32 = jax.block_until_ready(fwd_f32(x))
    assert out_f32.shape == (B, S, output_size)
    assert jnp.allclose(out_f32, ref, atol=1e-4, rtol=1e-4), "f32 mismatch vs reference"

    # --- default bf16 compute path (production config) vs bf16 reference ---
    fwd = make_swiglu(W, V)                       # bf16 compute, weights packed once
    out = jax.block_until_ready(fwd(x))
    assert out.shape == (B, S, output_size)
    assert out.dtype == x.dtype                   # output kept in the input dtype
    xb, Wb, Vb = (t.astype(jnp.bfloat16) for t in (x, W, V))
    ab = jnp.dot(xb, Wb.T, preferred_element_type=jnp.float32)
    bb = jnp.dot(xb, Vb.T, preferred_element_type=jnp.float32)
    ref_bf = ab * jax.nn.sigmoid(ab) * bb
    assert jnp.allclose(out, ref_bf, atol=1e-2, rtol=1e-2), "bf16 mismatch vs reference"

    # --- K-tiled (accumulator) path: H > tk forces the 3-D grid + scratch ---
    H2, O2 = 256, 128
    x2 = jax.random.normal(kx2, (B, S, H2), dtype=jnp.float32)
    W2 = jax.random.normal(kw2, (O2, H2), dtype=jnp.float32) * 0.05
    V2 = jax.random.normal(kv2, (O2, H2), dtype=jnp.float32) * 0.05
    fwd2 = make_swiglu(W2, V2, compute_dtype=jnp.float32, tk=128)
    out2 = jax.block_until_ready(fwd2(x2))
    a2 = x2 @ W2.T
    ref2 = (a2 * jax.nn.sigmoid(a2)) * (x2 @ V2.T)
    assert out2.shape == (B, S, O2)
    assert jnp.allclose(out2, ref2, atol=1e-3, rtol=1e-3), "K-tiled path mismatch"

    print("KERNEL_OK")
</pallas_src>

<mosaic_0001>
module attributes {stable_mosaic.version = 11 : i64} {
  func.func @_swiglu_kernel_fused(%arg0: i32, %arg1: i32, %arg2: memref<16x128xf32, #tpu.memory_space<vmem>>, %arg3: memref<128x256xf32, #tpu.memory_space<vmem>>, %arg4: memref<16x128xf32, #tpu.memory_space<vmem>>) attributes {dimension_semantics = [#tpu.dimension_semantics<parallel>, #tpu.dimension_semantics<parallel>], iteration_bounds = array<i64: 1, 1>, scalar_prefetch = 0 : i64, scratch_operands = 0 : i64, tpu.core_type = #tpu.core_type<tc>, window_params = [{transform_indices = @transform_0, window_bounds = array<i64: 16, 128>}, {transform_indices = @transform_1, window_bounds = array<i64: 128, 256>}, {transform_indices = @transform_2, window_bounds = array<i64: 16, 128>}]} {
    %c0 = arith.constant 0 : index
    %c0_0 = arith.constant 0 : index
    %0 = vector.load %arg2[%c0, %c0_0] : memref<16x128xf32, #tpu.memory_space<vmem>>, vector<16x128xf32>
    %c0_1 = arith.constant 0 : index
    %c0_2 = arith.constant 0 : index
    %1 = vector.load %arg3[%c0_1, %c0_2] : memref<128x256xf32, #tpu.memory_space<vmem>>, vector<128x256xf32>
    %cst = arith.constant dense<0.000000e+00> : vector<16x256xf32>
    %2 = tpu.matmul %0, %1, %cst {dimension_numbers = #tpu.dot_dimension_numbers<[1], [0], [0], [1], [0, 0, 1, 1], [], []>} : vector<16x128xf32>, vector<128x256xf32>, vector<16x256xf32> -> vector<16x256xf32>
    %3 = vector.extract_strided_slice %2 {offsets = [0, 0], sizes = [16, 128], strides = [1, 1]} : vector<16x256xf32> to vector<16x128xf32>
    %4 = vector.extract_strided_slice %2 {offsets = [0, 128], sizes = [16, 128], strides = [1, 1]} : vector<16x256xf32> to vector<16x128xf32>
    %5 = arith.negf %3 : vector<16x128xf32>
    %6 = math.exp %5 : vector<16x128xf32>
    %cst_3 = arith.constant 1.000000e+00 : f32
    %7 = vector.broadcast %cst_3 : f32 to vector<16x128xf32>
    %8 = arith.addf %7, %6 : vector<16x128xf32>
    %9 = arith.divf %7, %8 : vector<16x128xf32>
    %10 = arith.mulf %3, %9 : vector<16x128xf32>
    %11 = arith.mulf %10, %4 : vector<16x128xf32>
    %c0_4 = arith.constant 0 : index
    %c0_5 = arith.constant 0 : index
    %12 = vector.load %arg4[%c0_4, %c0_5] : memref<16x128xf32, #tpu.memory_space<vmem>>, vector<16x128xf32>
    tpu.vector_store %arg4[%c0_4, %c0_5], %11 {strides = array<i32>} : memref<16x128xf32, #tpu.memory_space<vmem>>, vector<16x128xf32>,
    return
  }
  func.func @transform_0(%arg0: i32, %arg1: i32) -> (i32, i32) {
    %c0_i32 = arith.constant 0 : i32
    %c0_i32_0 = arith.constant 0 : i32
    return %arg0, %c0_i32 : i32, i32
  }
  func.func @transform_1(%arg0: i32, %arg1: i32) -> (i32, i32) {
    %c0_i32 = arith.constant 0 : i32
    %c0_i32_0 = arith.constant 0 : i32
    return %c0_i32, %arg1 : i32, i32
  }
  func.func @transform_2(%arg0: i32, %arg1: i32) -> (i32, i32) {
    %c0_i32 = arith.constant 0 : i32
    return %arg0, %arg1 : i32, i32
  }
}

</mosaic_0001>

<llo_original>
// kernel: tpu_custom_call.1
$region0: #{tpu_custom_call.1}
  #allocation0 [shape = 'u32[]', space=smem, size = 0x4, offset = 0x4, fixed_abs, tag = 'smem constant byte address 0x4 - core index']
  #allocation1 [shape = 'u32[144,128]{1,0:T(1,128)}', space=vmem, size = 0x12000, scoped, tag = 'internal scratch']
  %s0 = inlined_call_operand.hbm [shape: f32[16,128], index: 0, kind: input, shape index: {}]
  %s1 = inlined_call_operand.hbm [shape: f32[128,256], index: 1, kind: input, shape index: {}]
  %s2 = inlined_call_operand.hbm [shape: f32[16,128], index: 2, kind: output, shape index: {}]
  %s3 = sld [smem:[#allocation0]]
  $region26: #{tpu_custom_call.1} parent=0
    _
  %s5 = ssub.s32 1, %s3
  %s6 = scalar_select 0, %s5, %s3
  $region1: #{tpu_custom_call.1} parent=0
    #allocation2 [shape = 'u8[8192]{0}', space=vmem, size = 0x2000, scoped, tag = 'input window, operand 0, single buffered']
    #allocation3 [shape = 's32[1]{0}', space=sflag, size = 0x4, scoped, tag = 'scoped memory for tpu_custom_call.1']
    #allocation4 [shape = 's32[1]{0}', space=sflag, size = 0x4, scoped, tag = 'scoped memory for tpu_custom_call.1']
    #allocation5 [shape = 'u8[131072]{0}', space=vmem, size = 0x20000, scoped, tag = 'input window, operand 1, single buffered']
    #allocation6 [shape = 's32[1]{0}', space=sflag, size = 0x4, scoped, tag = 'scoped memory for tpu_custom_call.1']
    #allocation7 [shape = 'u8[8192]{0}', space=vmem, size = 0x2000, scoped, tag = 'output window, operand 0, single buffered']
    %7 = vsyncpa [#allocation3], 0
    %8 = vsyncpa [#allocation6], 0
    %9 = vsyncpa [#allocation4], 0
    // Predicated region
    $region2: #{tpu_custom_call.1} parent=1 // pred_check
      _
    $region3: #{tpu_custom_call.1} parent=1 // pred_check_branch
      %11 = sbr.rel (0) target = $region5
    $region4: #{tpu_custom_call.1} parent=1 // pred_region
      %s13 = ssub.s32 256, 256
      %14 = vsyncadd [#allocation3], %s13
      %s15 = sshll.u32 [#allocation2], 4
      %s16 = int_to_ptr.vmem [resolvable:$true] %s15
      %21 = dma.hbm_to_vmem [thread:$0]  %s0, 256, %s16, [#allocation3], 128, 128, 8
    $region5: #{tpu_custom_call.1} parent=1 // pred_fallthru
      _
    // Predicated region
    $region6: #{tpu_custom_call.1} parent=1 // pred_check
      _
    $region7: #{tpu_custom_call.1} parent=1 // pred_check_branch
      %23 = sbr.rel (0) target = $region9
    $region8: #{tpu_custom_call.1} parent=1 // pred_region
      %s25 = ssub.s32 4096, 4096
      %26 = vsyncadd [#allocation6], %s25
      %s27 = sshll.u32 [#allocation5], 4
      %s28 = int_to_ptr.vmem [resolvable:$true] %s27
      %33 = dma.hbm_to_vmem [thread:$0]  %s1, 4096, %s28, [#allocation6], 256, 256, 16
    $region9: #{tpu_custom_call.1} parent=1 // pred_fallthru
      _
    // Predicated region
    $region10: #{tpu_custom_call.1} parent=1 // pred_check
      _
    $region11: #{tpu_custom_call.1} parent=1 // pred_check_branch
      %35 = sbr.rel (0) target = $region13
    $region12: #{tpu_custom_call.1} parent=1 // pred_region
      %36 = dma.done [#allocation3], 256
    $region13: #{tpu_custom_call.1} parent=1 // pred_fallthru
      _
    // Predicated region
    $region14: #{tpu_custom_call.1} parent=1 // pred_check
      _
    $region15: #{tpu_custom_call.1} parent=1 // pred_check_branch
      %38 = sbr.rel (0) target = $region17
    $region16: #{tpu_custom_call.1} parent=1 // pred_region
      %39 = dma.done [#allocation6], 4096
    $region17: #{tpu_custom_call.1} parent=1 // pred_fallthru
      _
    %v40 = vld [vmem:[#allocation2] sm:$0xff]
    %v41 = vld [vmem:[#allocation2 + $0x8] sm:$0xff]
    %v42 = vld [vmem:[#allocation5] sm:$0xff]
    %v43 = vld [vmem:[#allocation5 + $0x8] sm:$0xff]
    %v44 = vld [vmem:[#allocation5 + $0x10] sm:$0xff]
    %v45 = vld [vmem:[#allocation5 + $0x18] sm:$0xff]
    %v46 = vld [vmem:[#allocation5 + $0x20] sm:$0xff]
    %v47 = vld [vmem:[#allocation5 + $0x28] sm:$0xff]
    %v48 = vld [vmem:[#allocation5 + $0x30] sm:$0xff]
    %v49 = vld [vmem:[#allocation5 + $0x38] sm:$0xff]
    %v50 = vld [vmem:[#allocation5 + $0x40] sm:$0xff]
    %v51 = vld [vmem:[#allocation5 + $0x48] sm:$0xff]
    %v52 = vld [vmem:[#allocation5 + $0x50] sm:$0xff]
    %v53 = vld [vmem:[#allocation5 + $0x58] sm:$0xff]
    %v54 = vld [vmem:[#allocation5 + $0x60] sm:$0xff]
    %v55 = vld [vmem:[#allocation5 + $0x68] sm:$0xff]
    %v56 = vld [vmem:[#allocation5 + $0x70] sm:$0xff]
    %v57 = vld [vmem:[#allocation5 + $0x78] sm:$0xff]
    %v58 = vld [vmem:[#allocation5 + $0x80] sm:$0xff]
    %v59 = vld [vmem:[#allocation5 + $0x88] sm:$0xff]
    %v60 = vld [vmem:[#allocation5 + $0x90] sm:$0xff]
    %v61 = vld [vmem:[#allocation5 + $0x98] sm:$0xff]
    %v62 = vld [vmem:[#allocation5 + $0xa0] sm:$0xff]
    %v63 = vld [vmem:[#allocation5 + $0xa8] sm:$0xff]
    %v64 = vld [vmem:[#allocation5 + $0xb0] sm:$0xff]
    %v65 = vld [vmem:[#allocation5 + $0xb8] sm:$0xff]
    %v66 = vld [vmem:[#allocation5 + $0xc0] sm:$0xff]
    %v67 = vld [vmem:[#allocation5 + $0xc8] sm:$0xff]
    %v68 = vld [vmem:[#allocation5 + $0xd0] sm:$0xff]
    %v69 = vld [vmem:[#allocation5 + $0xd8] sm:$0xff]
    %v70 = vld [vmem:[#allocation5 + $0xe0] sm:$0xff]
    %v71 = vld [vmem:[#allocation5 + $0xe8] sm:$0xff]
    %v72 = vld [vmem:[#allocation5 + $0xf0] sm:$0xff]
    %v73 = vld [vmem:[#allocation5 + $0xf8] sm:$0xff]
    %74 = vmatprep.subr.mxu0 %v43
    %75 = vmatpush1.msra.mxu0 %v42
    %76 = vmatprep.subr.mxu0 %v45
    %77 = vmatpush1.msra.mxu0 %v44
    %78 = vmatprep.subr.mxu0 %v47
    %79 = vmatpush1.msra.mxu0 %v46
    %80 = vmatprep.subr.mxu0 %v49
    %81 = vmatpush1.msra.mxu0 %v48
    %82 = vmatprep.subr.mxu0 %v51
    %83 = vmatpush1.msra.mxu0 %v50
    %84 = vmatprep.subr.mxu0 %v53
    %85 = vmatpush1.msra.mxu0 %v52
    %86 = vmatprep.subr.mxu0 %v55
    %87 = vmatpush1.msra.mxu0 %v54
    %88 = vmatprep.subr.mxu0 %v57
    %89 = vmatpush1.msra.mxu0 %v56
    %90 = vmatprep.subr.mxu0 %v59
    %91 = vmatpush1.msra.mxu0 %v58
    %92 = vmatprep.subr.mxu0 %v61
    %93 = vmatpush1.msra.mxu0 %v60
    %94 = vmatprep.subr.mxu0 %v63
    %95 = vmatpush1.msra.mxu0 %v62
    %96 = vmatprep.subr.mxu0 %v65
    %97 = vmatpush1.msra.mxu0 %v64
    %98 = vmatprep.subr.mxu0 %v67
    %99 = vmatpush1.msra.mxu0 %v66
    %100 = vmatprep.subr.mxu0 %v69
    %101 = vmatpush1.msra.mxu0 %v68
    %102 = vmatprep.subr.mxu0 %v71
    %103 = vmatpush1.msra.mxu0 %v70
    %104 = vmatprep.subr.mxu0 %v73
    %105 = vmatpush1.msra.mxu0 %v72
    %106 = vmatprep.subr.mxu0 0.0
    %107 = vmatpush1.msra.mxu0 0.0
    %108 = vmatprep.subr.mxu0 0.0
    %109 = vmatpush1.msra.mxu0 0.0
    %110 = vmatprep.subr.mxu0 0.0
    %111 = vmatpush1.msra.mxu0 0.0
    %112 = vmatprep.subr.mxu0 0.0
    %113 = vmatpush1.msra.mxu0 0.0
    %114 = vmatprep.subr.mxu0 0.0
    %115 = vmatpush1.msra.mxu0 0.0
    %116 = vmatprep.subr.mxu0 0.0
    %117 = vmatpush1.msra.mxu0 0.0
    %118 = vmatprep.subr.mxu0 0.0
    %119 = vmatpush1.msra.mxu0 0.0
    %120 = vmatprep.subr.mxu0 0.0
    %121 = vmatpush1.msra.mxu0 0.0
    %122 = vmatprep.subr.mxu0 0.0
    %123 = vmatpush1.msra.mxu0 0.0
    %124 = vmatprep.subr.mxu0 0.0
    %125 = vmatpush1.msra.mxu0 0.0
    %126 = vmatprep.subr.mxu0 0.0
    %127 = vmatpush1.msra.mxu0 0.0
    %128 = vmatprep.subr.mxu0 0.0
    %129 = vmatpush1.msra.mxu0 0.0
    %130 = vmatprep.subr.mxu0 0.0
    %131 = vmatpush1.msra.mxu0 0.0
    %132 = vmatprep.subr.mxu0 0.0
    %133 = vmatpush1.msra.mxu0 0.0
    %134 = vmatprep.subr.mxu0 0.0
    %135 = vmatpush1.msra.mxu0 0.0
    %136 = vmatprep.subr.mxu0 0.0
    %137 = vmatpush1.msra.mxu0 0.0
    %138 = vmatprep.mubr.f32.mxu0 0.0
    %139 = vmatmul.mubr.f32.gmra.mrb[0].mxu0 %v40
    %v140 = vpop.f32.mrb[0].mxu0
    %v141 = vadd.f32 0.0, %v140
    %v142 = vpop.f32.mrb[0].mxu0
    %v143 = vadd.f32 0.0, %v142
    %144 = vmatprep.mubr.f32.mxu0 0.0
    %145 = vmatmul.mubr.f32.gmra.mrb[0].mxu0 %v41
    %v146 = vpop.f32.mrb[0].mxu0
    %v147 = vadd.f32 0.0, %v146
    %v148 = vpop.f32.mrb[0].mxu0
    %v149 = vadd.f32 0.0, %v148
    %150 = vdwg.mxu0
    %v151 = vxor.u32 %v141, 2147483648
    %v152 = vxor.u32 %v147, 2147483648
    %v153 = vmul.f32 %v151, 1.442695
    %v154 = vpow.pop %v153
    %v155 = vmul.f32 %v152, 1.442695
    %v156 = vpow.pop %v155
    %v157 = vadd.f32 %v154, 1.0
    %v158 = vadd.f32 %v156, 1.0
    %v159 = vrcp.pop %v157
    %v160 = vmul.f32 1.0, %v159
    %v161 = vrcp.pop %v158
    %v162 = vmul.f32 1.0, %v161
    %v163 = vmul.f32 %v141, %v160
    %v164 = vmul.f32 %v147, %v162
    %v165 = vmul.f32 %v163, %v143
    %v166 = vmul.f32 %v164, %v149
    %167 = vst [vmem:[#allocation7] sm:$0xff] %v165
    %168 = vst [vmem:[#allocation7 + $0x8] sm:$0xff] %v166
    // Predicated region
    $region18: #{tpu_custom_call.1} parent=1 // pred_check
      _
    $region19: #{tpu_custom_call.1} parent=1 // pred_check_branch
      %170 = sbr.rel (0) target = $region21
    $region20: #{tpu_custom_call.1} parent=1 // pred_region
      %s172 = ssub.s32 256, 256
      %173 = vsyncadd [#allocation4], %s172
      %s174 = sshll.u32 [#allocation7], 4
      %s175 = int_to_ptr.vmem [resolvable:$true] %s174
      %180 = dma.vmem_to_hbm [thread:$0]  %s175, 256, %s2, [#allocation4], 128, 128, 8
    $region21: #{tpu_custom_call.1} parent=1 // pred_fallthru
      _
    // Predicated region
    $region22: #{tpu_custom_call.1} parent=1 // pred_check
      _
    $region23: #{tpu_custom_call.1} parent=1 // pred_check_branch
      %182 = sbr.rel (0) target = $region25
    $region24: #{tpu_custom_call.1} parent=1 // pred_region
      %183 = dma.done [#allocation4], 256
    $region25: #{tpu_custom_call.1} parent=1 // pred_fallthru
      _
    %184 = vsyncpa [#allocation3], 1
    %185 = vsyncpa [#allocation6], 1
    %186 = vsyncpa [#allocation4], 1

</llo_original>
